<compile_context>
chip_gen: v5e
topology: v5e:2x2
jax: 0.10.0
libtpu: 0.0.40
codegen_flags: <defaults>
</compile_context>

<pallas_src>
import math

import jax
import jax.numpy as jnp
from jax.experimental import pallas as pl
from jax.experimental.pallas import tpu as pltpu


def _make_dma_copy_kernel(row_chunks):
    """Build a kernel that copies a (rows, cols) array HBM->HBM via DMA.

    `row_chunks` is a static tuple of (row_start, row_size).  All chunk
    copies are started first (kept in flight, one DMA semaphore each), then
    waited on, so multiple DMA engines / descriptors overlap.
    """

    def kernel(x_hbm, o_hbm, sems):
        copies = []
        for i, (start, size) in enumerate(row_chunks):
            cp = pltpu.make_async_copy(
                x_hbm.at[pl.ds(start, size), :],
                o_hbm.at[pl.ds(start, size), :],
                sems.at[i],
            )
            cp.start()
            copies.append(cp)
        for cp in copies:
            cp.wait()

    return kernel


def _choose_2d_view(total: int, out_shape: tuple) -> tuple:
    """Pick an (R, C) row-major factorization of `total` elements.

    Lane density is irrelevant for the HBM->HBM DMA (row slices are
    contiguous byte ranges), but a moderate C keeps descriptors simple and
    leaves many rows available for chunking.
    """
    if total % 128 == 0:
        c = 128
        while total % (c * 2) == 0 and c * 2 <= 1024:
            c *= 2
    elif len(out_shape) >= 1 and out_shape[-1] > 0:
        c = out_shape[-1]
    else:
        c = 1
    return total // c, c


def _row_chunks(rows: int, cols: int, itemsize: int, num_chunks=None) -> tuple:
    """Split `rows` into 1-4 contiguous chunks (static python ints)."""
    total_bytes = rows * cols * itemsize
    if num_chunks is None:
        if total_bytes <= (1 << 20):        # <= 1 MiB: one descriptor is enough
            n = 1
        elif total_bytes <= (8 << 20):      # <= 8 MiB: 2 in flight
            n = 2
        else:                               # big: 4 in flight
            n = 4
    else:
        n = int(num_chunks)
    n = max(1, min(n, rows))

    base, rem = divmod(rows, n)
    chunks, start = [], 0
    for i in range(n):
        size = base + (1 if i < rem else 0)
        if size > 0:
            chunks.append((start, size))
            start += size
    return tuple(chunks)


def squeeze_pallas(x, dim, *, num_chunks=None):
    """Equivalent of torch.squeeze(x, dim=dim); the copy runs as Pallas DMA."""
    nd = x.ndim
    d = dim + nd if dim < 0 else dim
    if not (0 <= d < nd):
        raise ValueError(f"dim {dim} out of range for ndim {nd}")

    if x.shape[d] != 1:
        # torch.squeeze is a no-op when the dim extent != 1 -> return the
        # input unchanged (zero HBM traffic, same as PyTorch).
        return x

    out_shape = tuple(s for i, s in enumerate(x.shape) if i != d)
    total = math.prod(x.shape)
    if total == 0:
        # Empty tensor: nothing to copy.
        return jnp.reshape(x, out_shape)

    rows, cols = _choose_2d_view(total, out_shape)
    chunks = _row_chunks(rows, cols, jnp.dtype(x.dtype).itemsize, num_chunks)

    # Row-major flatten of a contiguous array -> bitcast, no extra copy.
    x2 = jnp.reshape(x, (rows, cols))

    y2 = pl.pallas_call(
        _make_dma_copy_kernel(chunks),
        out_shape=jax.ShapeDtypeStruct((rows, cols), x.dtype),
        in_specs=[pl.BlockSpec(memory_space=pl.ANY)],   # raw HBM ref, no auto-DMA
        out_specs=pl.BlockSpec(memory_space=pl.ANY),    # write output via DMA
        scratch_shapes=[pltpu.SemaphoreType.DMA((len(chunks),))],
    )(x2)

    return jnp.reshape(y2, out_shape)


if __name__ == "__main__":
    key = jax.random.PRNGKey(0)
    k1, k2, k3 = jax.random.split(key, 3)

    # Case 1: module's intended use -- squeeze the size-1 channel dim.
    x = jax.random.normal(k1, (2, 1, 16, 16), dtype=jnp.float32)
    y = squeeze_pallas(x, dim=1)            # Squeeze(dim=1)
    jax.block_until_ready(y)
    ref = jnp.squeeze(x, axis=1)
    assert y.shape == ref.shape == (2, 16, 16), (y.shape, ref.shape)
    assert bool(jnp.array_equal(y, ref)), "value mismatch vs jnp.squeeze"

    # Case 2: torch semantics when dim extent != 1 -> zero-work identity.
    y2 = squeeze_pallas(x, dim=0)           # shape[0] == 2 -> unchanged, no copy
    jax.block_until_ready(y2)
    assert y2.shape == x.shape
    assert bool(jnp.array_equal(y2, x)), "no-op squeeze mismatch"

    # Case 3: multi-chunk DMA path (force 4 descriptors in flight).
    x3 = jax.random.normal(k2, (64, 1, 32, 128), dtype=jnp.float32)
    y3 = squeeze_pallas(x3, dim=1, num_chunks=4)
    jax.block_until_ready(y3)
    assert y3.shape == (64, 32, 128)
    assert bool(jnp.array_equal(y3, jnp.squeeze(x3, axis=1))), "chunked copy mismatch"

    # Case 4: element count not a multiple of 128 -> contiguous HBM->HBM DMA
    # (no masked stores; no VMEM layout involved).
    x4 = jax.random.normal(k3, (2, 1, 3, 5), dtype=jnp.float32)
    y4 = squeeze_pallas(x4, dim=1)
    jax.block_until_ready(y4)
    assert y4.shape == (2, 3, 5)
    assert bool(jnp.array_equal(y4, jnp.squeeze(x4, axis=1))), "odd-shape copy mismatch"

    print("KERNEL_OK")
</pallas_src>

<mosaic_0001>
module attributes {stable_mosaic.version = 11 : i64} {
  func.func @kernel(%arg0: memref<1x512xf32, #tpu.memory_space<any>>, %arg1: memref<1x512xf32, #tpu.memory_space<any>>, %arg2: memref<1x!tpu.dma_semaphore, #tpu.memory_space<semaphore_mem>>) attributes {dimension_semantics = [], scalar_prefetch = 0 : i64, scratch_operands = 1 : i64, tpu.core_type = #tpu.core_type<tc>} {
    %c0_i32 = arith.constant 0 : i32
    %c0_i32_0 = arith.constant 0 : i32
    %c0_i32_1 = arith.constant 0 : i32
    %0 = tpu.memref_slice %arg0[%c0_i32_0, %c0_i32_1] : memref<1x512xf32, #tpu.memory_space<any>> -> memref<1x512xf32, #tpu.memory_space<any>>
    %c0_i32_2 = arith.constant 0 : i32
    %c0_i32_3 = arith.constant 0 : i32
    %1 = tpu.memref_slice %arg1[%c0_i32_2, %c0_i32_3] : memref<1x512xf32, #tpu.memory_space<any>> -> memref<1x512xf32, #tpu.memory_space<any>>
    %2 = tpu.memref_slice %arg2[%c0_i32] : memref<1x!tpu.dma_semaphore, #tpu.memory_space<semaphore_mem>> -> memref<1x!tpu.dma_semaphore, #tpu.memory_space<semaphore_mem>>
    %3 = tpu.memref_squeeze %2 : memref<1x!tpu.dma_semaphore, #tpu.memory_space<semaphore_mem>> -> memref<!tpu.dma_semaphore, #tpu.memory_space<semaphore_mem>>
    tpu.enqueue_dma source(%0 : memref<1x512xf32, #tpu.memory_space<any>>) target(%1 : memref<1x512xf32, #tpu.memory_space<any>>) target_semaphore(%3 : memref<!tpu.dma_semaphore, #tpu.memory_space<semaphore_mem>>)
    %c0_i32_4 = arith.constant 0 : i32
    %c0_i32_5 = arith.constant 0 : i32
    %c0_i32_6 = arith.constant 0 : i32
    %4 = tpu.memref_slice %arg0[%c0_i32_5, %c0_i32_6] : memref<1x512xf32, #tpu.memory_space<any>> -> memref<1x512xf32, #tpu.memory_space<any>>
    %c0_i32_7 = arith.constant 0 : i32
    %c0_i32_8 = arith.constant 0 : i32
    %5 = tpu.memref_slice %arg1[%c0_i32_7, %c0_i32_8] : memref<1x512xf32, #tpu.memory_space<any>> -> memref<1x512xf32, #tpu.memory_space<any>>
    %6 = tpu.memref_slice %arg2[%c0_i32_4] : memref<1x!tpu.dma_semaphore, #tpu.memory_space<semaphore_mem>> -> memref<1x!tpu.dma_semaphore, #tpu.memory_space<semaphore_mem>>
    %7 = tpu.memref_squeeze %6 : memref<1x!tpu.dma_semaphore, #tpu.memory_space<semaphore_mem>> -> memref<!tpu.dma_semaphore, #tpu.memory_space<semaphore_mem>>
    tpu.wait_dma2 semaphore(%7 : memref<!tpu.dma_semaphore, #tpu.memory_space<semaphore_mem>>) src(%4 : memref<1x512xf32, #tpu.memory_space<any>>) dst(%5 : memref<1x512xf32, #tpu.memory_space<any>>)
    return
  }
}

</mosaic_0001>

<llo_original>
// kernel: tpu_custom_call.1
$region0: #{tpu_custom_call.1}
  #allocation0 [shape = 'u32[]', space=smem, size = 0x4, offset = 0x4, fixed_abs, tag = 'smem constant byte address 0x4 - core index']
  #allocation1 [shape = 'u32[72,128]{1,0:T(1,128)}', space=vmem, size = 0x9000, scoped, tag = 'internal scratch']
  #allocation2 [shape = 's32[1]{0}', space=sflag, size = 0x4, scoped, tag = 'scratch operand']
  #allocation3 [shape = 's32[]', space=sflag, size = 0x4, offset = 0, fixed_abs, tag = 'sflag constant byte address 0x0 - dummy sync flag']
  #allocation4 [shape = 'u32[0]{0}', space=smem, size = 0, offset = 0, fixed_abs, tag = 'smem constant byte address 0x0 - null']
  %s0 = inlined_call_operand.hbm [shape: f32[1,512], index: 0, kind: input, shape index: {}]
  %s1 = inlined_call_operand.hbm [shape: f32[1,512], index: 1, kind: output, shape index: {}]
  %s2 = sld [smem:[#allocation0]]
  $region2: #{tpu_custom_call.1} parent=0
    _
  %s4 = ssub.s32 1, %s2
  %s5 = scalar_select 0, %s4, %s2
  %s7 = sshll.u32 1, 14
  %s8 = sxor.u32 4294967295, %s7
  %s10 = sshll.u32 %s0, 4
  %s11 = int_to_ptr.hbm [resolvable:$true] %s10
  %s12 = sshll.u32 %s1, 4
  %s13 = int_to_ptr.hbm [resolvable:$true] %s12
  %16 = dma.general %s11, 64, %s13, [#allocation2], [#allocation3], [#allocation4], 0, 0
  %s17 = smul.u32 1, 4
  %s18 = sshll.u32 %s17, 4
  %19 = dma.done [#allocation2], %s18
  %20 = vsyncmov [#allocation2]
  %s21 = vpop.sfrf %20
  %p22 = scmp.eq.s32.totalorder %s21, 0
  %p23 = pneg %p22
  %25 = shalt.err (%p23)

</llo_original>
